<compile_context>
chip_gen: v7x
topology: tpu7x:2x2x1
jax: 0.10.0
libtpu: 0.0.40
codegen_flags: <defaults>
</compile_context>

<pallas_src>
import functools

import jax
import jax.numpy as jnp
from jax import lax
from jax.experimental import pallas as pl
from jax.experimental.pallas import tpu as pltpu


def _tap(ref, t, l_out, stride):
    """Ref-sliced tap load (no value slicing)."""
    if stride == 1:
        return ref[:, t:t + l_out, :]
    return ref[:, pl.ds(t, l_out, stride=stride), :]


def _conv_taps(src_ref, w_ref, *, k, l_out, stride):
    """Conv1d as k accumulated per-tap matmuls.

    src_ref: (N, L_src, C_src) f32 VMEM scratch (zero halo already written)
    w_ref:   (k, C_src, C_pad) bf16
    returns: (N*l_out, C_pad) f32 accumulator.
    """
    n = src_ref.shape[0]
    c_pad = w_ref.shape[-1]
    m = n * l_out
    acc = jnp.zeros((m, c_pad), jnp.float32)
    for t in range(k):
        tap = _tap(src_ref, t, l_out, stride)                    # (N, l_out, C_src) f32
        tap2d = tap.reshape(m, tap.shape[-1]).astype(jnp.bfloat16)  # bf16 MXU operand
        acc = acc + jnp.dot(tap2d, w_ref[t],                     # w_ref[t]: (C_src, C_pad) bf16
                            preferred_element_type=jnp.float32)
    return acc


def _bn_lrelu(acc, gb_ref, *, negative_slope, eps):
    """Train-mode BatchNorm (batch stats, biased var) + LeakyReLU, folded affine. f32."""
    m = acc.shape[0]
    inv_m = 1.0 / m
    s = jnp.sum(acc, axis=0, keepdims=True)                      # one-pass stats
    ss = jnp.sum(acc * acc, axis=0, keepdims=True)
    mean = s * inv_m
    var = jnp.maximum(ss * inv_m - mean * mean, 0.0)             # biased (train) variance
    gamma = gb_ref[0:1, :]
    beta = gb_ref[1:2, :]
    scale = gamma * lax.rsqrt(var + eps)                         # folded BN affine
    shift = beta - mean * scale
    y = acc * scale + shift
    return jnp.where(y >= 0, y, negative_slope * y)              # LeakyReLU(0.2)


def double_conv1d_kernel(x_ref, w1_ref, gb1_ref, w2_ref, gb2_ref,
                         out_ref, xpad_ref, hpad_ref,
                         *, k, stride, padding, negative_slope, eps):
    """Fused (Conv1d -> BN(batch stats) -> LeakyReLU) x 2.

    x_ref:    (N, L, C_in)            channels-last
    w1_ref:   (k, C_in,  C_pad) bf16  per-tap weight matrices
    w2_ref:   (k, C_pad, C_pad) bf16
    gb*_ref:  (2, C_pad) f32          row 0 = gamma (0 in padded lanes), row 1 = beta
    out_ref:  (N, L_out2, C_pad) f32  lane-dense store
    xpad_ref: (N, L+2p, C_in)     f32 VMEM scratch (zero halo)
    hpad_ref: (N, L_out1+2p, C_pad) f32 VMEM scratch (zero halo, intermediate)
    """
    n, l_in, c_in = x_ref.shape
    _, l2, c_pad = out_ref.shape
    l1 = hpad_ref.shape[1] - 2 * padding

    # ---- block 1: halo-only zeroing -> per-tap matmuls -> BN -> LeakyReLU
    if padding > 0:
        xpad_ref[:, :padding, :] = jnp.zeros((n, padding, c_in), xpad_ref.dtype)
        xpad_ref[:, padding + l_in:, :] = jnp.zeros((n, padding, c_in), xpad_ref.dtype)
    xpad_ref[:, padding:padding + l_in, :] = x_ref[...].astype(xpad_ref.dtype)

    acc1 = _conv_taps(xpad_ref, w1_ref, k=k, l_out=l1, stride=stride)
    y1 = _bn_lrelu(acc1, gb1_ref, negative_slope=negative_slope, eps=eps)

    # ---- block 2: intermediate stays in VMEM (zero-halo scratch), same recipe
    if padding > 0:
        hpad_ref[:, :padding, :] = jnp.zeros((n, padding, c_pad), hpad_ref.dtype)
        hpad_ref[:, padding + l1:, :] = jnp.zeros((n, padding, c_pad), hpad_ref.dtype)
    hpad_ref[:, padding:padding + l1, :] = y1.reshape(n, l1, c_pad)

    acc2 = _conv_taps(hpad_ref, w2_ref, k=k, l_out=l2, stride=stride)
    y2 = _bn_lrelu(acc2, gb2_ref, negative_slope=negative_slope, eps=eps)

    out_ref[...] = y2.reshape(n, l2, c_pad).astype(out_ref.dtype)


def _prep_block_params(w_torch, gamma, beta, cin_pad, c_pad):
    """PyTorch conv weight (C_out, C_in, K) -> per-tap bf16 matrices + packed gamma/beta."""
    co, ci, k = w_torch.shape
    wt = jnp.transpose(w_torch, (2, 1, 0))                                # (K, C_in, C_out)
    wt = jnp.pad(wt, ((0, 0), (0, cin_pad - ci), (0, c_pad - co)))        # zero-padded lanes
    wt = wt.astype(jnp.bfloat16)                                          # bf16 MXU operand
    gb = jnp.stack([jnp.pad(gamma, (0, c_pad - co)),                      # padded gamma = 0
                    jnp.pad(beta, (0, c_pad - co))]).astype(jnp.float32)  # (2, C_pad)
    return wt, gb


def double_conv1d(x_ncl, params, *, k, stride, padding):
    """DoubleConv1d forward. x_ncl: (N, C_in, L) -> (N, C_out, L_out2)."""
    n, c_in, l = x_ncl.shape
    (w1, g1, bt1), (w2, g2, bt2) = params
    c_out = w1.shape[0]
    c_pad = max(128, ((c_out + 127) // 128) * 128)                        # lane-dense channels

    l1 = (l + 2 * padding - k) // stride + 1
    l2 = (l1 + 2 * padding - k) // stride + 1

    x_nlc = jnp.transpose(x_ncl, (0, 2, 1)).astype(jnp.float32)           # NCL -> NLC (glue)
    w1t, gb1 = _prep_block_params(w1, g1, bt1, c_in, c_pad)
    w2t, gb2 = _prep_block_params(w2, g2, bt2, c_pad, c_pad)

    kern = functools.partial(double_conv1d_kernel, k=k, stride=stride,
                             padding=padding, negative_slope=0.2, eps=1e-5)
    vmem = pl.BlockSpec(memory_space=pltpu.MemorySpace.VMEM)

    out = pl.pallas_call(
        kern,
        out_shape=jax.ShapeDtypeStruct((n, l2, c_pad), jnp.float32),
        in_specs=[vmem] * 5,
        out_specs=vmem,
        scratch_shapes=[
            pltpu.VMEM((n, l + 2 * padding, c_in), jnp.float32),          # padded input
            pltpu.VMEM((n, l1 + 2 * padding, c_pad), jnp.float32),        # padded intermediate
        ],
    )(x_nlc, w1t, gb1, w2t, gb2)

    return jnp.transpose(out[:, :, :c_out], (0, 2, 1))                    # NLC -> NCL (glue)


def init_conv_norm_relu_params(key, in_channels, out_channels, k):
    """Matches weights_init: xavier_uniform_ conv weight; BN gamma=1, beta=0.

    Conv bias (zero-initialized in the module) is omitted: train-mode BatchNorm's mean
    subtraction cancels a per-channel bias exactly, so it never affects the forward output.
    """
    fan_in, fan_out = in_channels * k, out_channels * k
    bound = (6.0 / (fan_in + fan_out)) ** 0.5
    w = jax.random.uniform(key, (out_channels, in_channels, k),
                           jnp.float32, -bound, bound)                    # PyTorch (Cout, Cin, K)
    gamma = jnp.ones((out_channels,), jnp.float32)
    beta = jnp.zeros((out_channels,), jnp.float32)
    return (w, gamma, beta)


def _reference_double_conv1d(x_ncl, params, *, stride, padding, eps=1e-5, slope=0.2,
                             matmul_dtype=jnp.float32):
    """Pure-JAX reference (train-mode BN, biased variance).

    matmul_dtype=bf16 mirrors the kernel's bf16 MXU operands (f32 accumulation);
    matmul_dtype=f32 is the exact module-semantics reference.
    """
    y = x_ncl
    for (w, gamma, beta) in params:
        y = lax.conv_general_dilated(
            y.astype(matmul_dtype), w.astype(matmul_dtype),
            window_strides=(stride,), padding=[(padding, padding)],
            dimension_numbers=("NCH", "OIH", "NCH"),
            preferred_element_type=jnp.float32)
        mean = jnp.mean(y, axis=(0, 2), keepdims=True)
        var = jnp.mean((y - mean) ** 2, axis=(0, 2), keepdims=True)
        y = (y - mean) * lax.rsqrt(var + eps) * gamma[None, :, None] + beta[None, :, None]
        y = jnp.where(y >= 0, y, slope * y)
    return y


if __name__ == "__main__":
    # DoubleConv1d(in_channels=4, out_channels=8, k=3, s=1, p=1)
    N, C_IN, C_OUT, L = 2, 4, 8, 16
    K, S, P = 3, 1, 1

    root = jax.random.PRNGKey(0)
    k_x, k_w1, k_w2 = jax.random.split(root, 3)

    x = jax.random.normal(k_x, (N, C_IN, L), jnp.float32)                 # PyTorch NCL input
    params = [
        init_conv_norm_relu_params(k_w1, C_IN, C_OUT, K),
        init_conv_norm_relu_params(k_w2, C_OUT, C_OUT, K),
    ]

    out = double_conv1d(x, params, k=K, stride=S, padding=P)
    out = jax.block_until_ready(out)

    l_out1 = (L + 2 * P - K) // S + 1
    l_out2 = (l_out1 + 2 * P - K) // S + 1
    assert out.shape == (N, C_OUT, l_out2), out.shape
    assert bool(jnp.all(jnp.isfinite(out)))

    # Tight check against a reference with matching bf16 MXU-operand precision.
    ref_bf16 = _reference_double_conv1d(x, params, stride=S, padding=P,
                                        matmul_dtype=jnp.bfloat16)
    err_bf16 = float(jnp.max(jnp.abs(out - ref_bf16)))
    assert err_bf16 < 2e-2, err_bf16

    # Looser check against the exact f32 module semantics (gap = bf16 operand rounding).
    ref_f32 = _reference_double_conv1d(x, params, stride=S, padding=P,
                                       matmul_dtype=jnp.float32)
    err_f32 = float(jnp.max(jnp.abs(out - ref_f32)))
    assert err_f32 < 1e-1, err_f32

    # TODO(synk): train-mode BatchNorm running_mean/running_var buffer updates are not
    # produced (forward output in train mode does not depend on them).
    print("KERNEL_OK")
</pallas_src>

<mosaic_0001>
module attributes {stable_mosaic.version = 11 : i64} {
  func.func @double_conv1d_kernel(%arg0: memref<2x16x4xf32, #tpu.memory_space<vmem>>, %arg1: memref<3x4x128xbf16, #tpu.memory_space<vmem>>, %arg2: memref<2x128xf32, #tpu.memory_space<vmem>>, %arg3: memref<3x128x128xbf16, #tpu.memory_space<vmem>>, %arg4: memref<2x128xf32, #tpu.memory_space<vmem>>, %arg5: memref<2x16x128xf32, #tpu.memory_space<vmem>>, %arg6: memref<2x18x4xf32, #tpu.memory_space<vmem>>, %arg7: memref<2x18x128xf32, #tpu.memory_space<vmem>>) attributes {dimension_semantics = [], scalar_prefetch = 0 : i64, scratch_operands = 2 : i64, tpu.core_type = #tpu.core_type<tc>} {
    %cst = arith.constant 0.000000e+00 : f32
    %0 = vector.broadcast %cst : f32 to vector<2x1x4xf32>
    %c0 = arith.constant 0 : index
    %c0_0 = arith.constant 0 : index
    %c0_1 = arith.constant 0 : index
    %1 = vector.load %arg6[%c0, %c0_0, %c0_1] : memref<2x18x4xf32, #tpu.memory_space<vmem>>, vector<2x1x4xf32>
    tpu.vector_store %arg6[%c0, %c0_0, %c0_1], %0 {strides = array<i32>} : memref<2x18x4xf32, #tpu.memory_space<vmem>>, vector<2x1x4xf32>,
    %cst_2 = arith.constant 0.000000e+00 : f32
    %2 = vector.broadcast %cst_2 : f32 to vector<2x1x4xf32>
    %c0_3 = arith.constant 0 : index
    %c17 = arith.constant 17 : index
    %c0_4 = arith.constant 0 : index
    %3 = vector.load %arg6[%c0_3, %c17, %c0_4] : memref<2x18x4xf32, #tpu.memory_space<vmem>>, vector<2x1x4xf32>
    tpu.vector_store %arg6[%c0_3, %c17, %c0_4], %2 {strides = array<i32>} : memref<2x18x4xf32, #tpu.memory_space<vmem>>, vector<2x1x4xf32>,
    %c0_5 = arith.constant 0 : index
    %c0_6 = arith.constant 0 : index
    %c0_7 = arith.constant 0 : index
    %4 = vector.load %arg0[%c0_5, %c0_6, %c0_7] : memref<2x16x4xf32, #tpu.memory_space<vmem>>, vector<2x16x4xf32>
    %c0_8 = arith.constant 0 : index
    %c1 = arith.constant 1 : index
    %c0_9 = arith.constant 0 : index
    %5 = vector.load %arg6[%c0_8, %c1, %c0_9] : memref<2x18x4xf32, #tpu.memory_space<vmem>>, vector<2x16x4xf32>
    tpu.vector_store %arg6[%c0_8, %c1, %c0_9], %4 {strides = array<i32>} : memref<2x18x4xf32, #tpu.memory_space<vmem>>, vector<2x16x4xf32>,
    %cst_10 = arith.constant 0.000000e+00 : f32
    %6 = vector.broadcast %cst_10 : f32 to vector<32x128xf32>
    %c0_11 = arith.constant 0 : index
    %c0_12 = arith.constant 0 : index
    %c0_13 = arith.constant 0 : index
    %7 = vector.load %arg6[%c0_11, %c0_12, %c0_13] : memref<2x18x4xf32, #tpu.memory_space<vmem>>, vector<2x16x4xf32>
    %8 = vector.shape_cast %7 : vector<2x16x4xf32> to vector<32x4xf32>
    %9 = arith.truncf %8 : vector<32x4xf32> to vector<32x4xbf16>
    %c0_14 = arith.constant 0 : index
    %c0_15 = arith.constant 0 : index
    %c0_16 = arith.constant 0 : index
    %10 = vector.load %arg1[%c0_14, %c0_15, %c0_16] : memref<3x4x128xbf16, #tpu.memory_space<vmem>>, vector<1x4x128xbf16>
    %11 = vector.shape_cast %10 : vector<1x4x128xbf16> to vector<4x128xbf16>
    %cst_17 = arith.constant dense<0.000000e+00> : vector<32x128xf32>
    %12 = tpu.matmul %9, %11, %cst_17 {dimension_numbers = #tpu.dot_dimension_numbers<[1], [0], [0], [1], [0, 0, 1, 1], [], []>} : vector<32x4xbf16>, vector<4x128xbf16>, vector<32x128xf32> -> vector<32x128xf32>
    %13 = arith.addf %6, %12 : vector<32x128xf32>
    %c0_18 = arith.constant 0 : index
    %c1_19 = arith.constant 1 : index
    %c0_20 = arith.constant 0 : index
    %14 = vector.load %arg6[%c0_18, %c1_19, %c0_20] : memref<2x18x4xf32, #tpu.memory_space<vmem>>, vector<2x16x4xf32>
    %15 = vector.shape_cast %14 : vector<2x16x4xf32> to vector<32x4xf32>
    %16 = arith.truncf %15 : vector<32x4xf32> to vector<32x4xbf16>
    %c1_21 = arith.constant 1 : index
    %c0_22 = arith.constant 0 : index
    %c0_23 = arith.constant 0 : index
    %17 = vector.load %arg1[%c1_21, %c0_22, %c0_23] : memref<3x4x128xbf16, #tpu.memory_space<vmem>>, vector<1x4x128xbf16>
    %18 = vector.shape_cast %17 : vector<1x4x128xbf16> to vector<4x128xbf16>
    %cst_24 = arith.constant dense<0.000000e+00> : vector<32x128xf32>
    %19 = tpu.matmul %16, %18, %cst_24 {dimension_numbers = #tpu.dot_dimension_numbers<[1], [0], [0], [1], [0, 0, 1, 1], [], []>} : vector<32x4xbf16>, vector<4x128xbf16>, vector<32x128xf32> -> vector<32x128xf32>
    %20 = arith.addf %13, %19 : vector<32x128xf32>
    %c0_25 = arith.constant 0 : index
    %c2 = arith.constant 2 : index
    %c0_26 = arith.constant 0 : index
    %21 = vector.load %arg6[%c0_25, %c2, %c0_26] : memref<2x18x4xf32, #tpu.memory_space<vmem>>, vector<2x16x4xf32>
    %22 = vector.shape_cast %21 : vector<2x16x4xf32> to vector<32x4xf32>
    %23 = arith.truncf %22 : vector<32x4xf32> to vector<32x4xbf16>
    %c2_27 = arith.constant 2 : index
    %c0_28 = arith.constant 0 : index
    %c0_29 = arith.constant 0 : index
    %24 = vector.load %arg1[%c2_27, %c0_28, %c0_29] : memref<3x4x128xbf16, #tpu.memory_space<vmem>>, vector<1x4x128xbf16>
    %25 = vector.shape_cast %24 : vector<1x4x128xbf16> to vector<4x128xbf16>
    %cst_30 = arith.constant dense<0.000000e+00> : vector<32x128xf32>
    %26 = tpu.matmul %23, %25, %cst_30 {dimension_numbers = #tpu.dot_dimension_numbers<[1], [0], [0], [1], [0, 0, 1, 1], [], []>} : vector<32x4xbf16>, vector<4x128xbf16>, vector<32x128xf32> -> vector<32x128xf32>
    %27 = arith.addf %20, %26 : vector<32x128xf32>
    %cst_31 = arith.constant dense<0.000000e+00> : vector<128xf32>
    %28 = vector.multi_reduction <add>, %27, %cst_31 [0] : vector<32x128xf32> to vector<128xf32>
    %29 = vector.shape_cast %28 : vector<128xf32> to vector<1x128xf32>
    %30 = arith.mulf %27, %27 : vector<32x128xf32>
    %cst_32 = arith.constant dense<0.000000e+00> : vector<128xf32>
    %31 = vector.multi_reduction <add>, %30, %cst_32 [0] : vector<32x128xf32> to vector<128xf32>
    %32 = vector.shape_cast %31 : vector<128xf32> to vector<1x128xf32>
    %cst_33 = arith.constant 3.125000e-02 : f32
    %33 = vector.broadcast %cst_33 : f32 to vector<1x128xf32>
    %34 = arith.mulf %29, %33 : vector<1x128xf32>
    %cst_34 = arith.constant 3.125000e-02 : f32
    %35 = vector.broadcast %cst_34 : f32 to vector<1x128xf32>
    %36 = arith.mulf %32, %35 : vector<1x128xf32>
    %37 = arith.mulf %34, %34 : vector<1x128xf32>
    %38 = arith.subf %36, %37 : vector<1x128xf32>
    %cst_35 = arith.constant 0.000000e+00 : f32
    %39 = vector.broadcast %cst_35 : f32 to vector<1x128xf32>
    %40 = arith.maximumf %38, %39 : vector<1x128xf32>
    %c0_36 = arith.constant 0 : index
    %c0_37 = arith.constant 0 : index
    %41 = vector.load %arg2[%c0_36, %c0_37] : memref<2x128xf32, #tpu.memory_space<vmem>>, vector<1x128xf32>
    %c1_38 = arith.constant 1 : index
    %c0_39 = arith.constant 0 : index
    %42 = vector.load %arg2[%c1_38, %c0_39] : memref<2x128xf32, #tpu.memory_space<vmem>>, vector<1x128xf32>
    %cst_40 = arith.constant 9.99999974E-6 : f32
    %43 = vector.broadcast %cst_40 : f32 to vector<1x128xf32>
    %44 = arith.addf %40, %43 : vector<1x128xf32>
    %45 = math.rsqrt %44 : vector<1x128xf32>
    %46 = arith.mulf %41, %45 : vector<1x128xf32>
    %47 = arith.mulf %34, %46 : vector<1x128xf32>
    %48 = arith.subf %42, %47 : vector<1x128xf32>
    %49 = vector.broadcast %46 : vector<1x128xf32> to vector<32x128xf32>
    %50 = arith.mulf %27, %49 : vector<32x128xf32>
    %51 = vector.broadcast %48 : vector<1x128xf32> to vector<32x128xf32>
    %52 = arith.addf %50, %51 : vector<32x128xf32>
    %cst_41 = arith.constant 0.000000e+00 : f32
    %53 = vector.broadcast %cst_41 : f32 to vector<32x128xf32>
    %54 = arith.cmpf oge, %52, %53 : vector<32x128xf32>
    %cst_42 = arith.constant 2.000000e-01 : f32
    %55 = vector.broadcast %cst_42 : f32 to vector<32x128xf32>
    %56 = arith.mulf %55, %52 : vector<32x128xf32>
    %57 = arith.select %54, %52, %56 : vector<32x128xi1>, vector<32x128xf32>
    %cst_43 = arith.constant 0.000000e+00 : f32
    %58 = vector.broadcast %cst_43 : f32 to vector<2x1x128xf32>
    %c0_44 = arith.constant 0 : index
    %c0_45 = arith.constant 0 : index
    %c0_46 = arith.constant 0 : index
    %59 = vector.load %arg7[%c0_44, %c0_45, %c0_46] : memref<2x18x128xf32, #tpu.memory_space<vmem>>, vector<2x1x128xf32>
    tpu.vector_store %arg7[%c0_44, %c0_45, %c0_46], %58 {strides = array<i32>} : memref<2x18x128xf32, #tpu.memory_space<vmem>>, vector<2x1x128xf32>,
    %cst_47 = arith.constant 0.000000e+00 : f32
    %60 = vector.broadcast %cst_47 : f32 to vector<2x1x128xf32>
    %c0_48 = arith.constant 0 : index
    %c17_49 = arith.constant 17 : index
    %c0_50 = arith.constant 0 : index
    %61 = vector.load %arg7[%c0_48, %c17_49, %c0_50] : memref<2x18x128xf32, #tpu.memory_space<vmem>>, vector<2x1x128xf32>
    tpu.vector_store %arg7[%c0_48, %c17_49, %c0_50], %60 {strides = array<i32>} : memref<2x18x128xf32, #tpu.memory_space<vmem>>, vector<2x1x128xf32>,
    %62 = vector.shape_cast %57 : vector<32x128xf32> to vector<2x16x128xf32>
    %c0_51 = arith.constant 0 : index
    %c1_52 = arith.constant 1 : index
    %c0_53 = arith.constant 0 : index
    %63 = vector.load %arg7[%c0_51, %c1_52, %c0_53] : memref<2x18x128xf32, #tpu.memory_space<vmem>>, vector<2x16x128xf32>
    tpu.vector_store %arg7[%c0_51, %c1_52, %c0_53], %62 {strides = array<i32>} : memref<2x18x128xf32, #tpu.memory_space<vmem>>, vector<2x16x128xf32>,
    %cst_54 = arith.constant 0.000000e+00 : f32
    %64 = vector.broadcast %cst_54 : f32 to vector<32x128xf32>
    %c0_55 = arith.constant 0 : index
    %c0_56 = arith.constant 0 : index
    %c0_57 = arith.constant 0 : index
    %65 = vector.load %arg7[%c0_55, %c0_56, %c0_57] : memref<2x18x128xf32, #tpu.memory_space<vmem>>, vector<2x16x128xf32>
    %66 = vector.shape_cast %65 : vector<2x16x128xf32> to vector<32x128xf32>
    %67 = arith.truncf %66 : vector<32x128xf32> to vector<32x128xbf16>
    %c0_58 = arith.constant 0 : index
    %c0_59 = arith.constant 0 : index
    %c0_60 = arith.constant 0 : index
    %68 = vector.load %arg3[%c0_58, %c0_59, %c0_60] : memref<3x128x128xbf16, #tpu.memory_space<vmem>>, vector<1x128x128xbf16>
    %69 = vector.shape_cast %68 : vector<1x128x128xbf16> to vector<128x128xbf16>
    %cst_61 = arith.constant dense<0.000000e+00> : vector<32x128xf32>
    %70 = tpu.matmul %67, %69, %cst_61 {dimension_numbers = #tpu.dot_dimension_numbers<[1], [0], [0], [1], [0, 0, 1, 1], [], []>} : vector<32x128xbf16>, vector<128x128xbf16>, vector<32x128xf32> -> vector<32x128xf32>
    %71 = arith.addf %64, %70 : vector<32x128xf32>
    %c0_62 = arith.constant 0 : index
    %c1_63 = arith.constant 1 : index
    %c0_64 = arith.constant 0 : index
    %72 = vector.load %arg7[%c0_62, %c1_63, %c0_64] : memref<2x18x128xf32, #tpu.memory_space<vmem>>, vector<2x16x128xf32>
    %73 = vector.shape_cast %72 : vector<2x16x128xf32> to vector<32x128xf32>
    %74 = arith.truncf %73 : vector<32x128xf32> to vector<32x128xbf16>
    %c1_65 = arith.constant 1 : index
    %c0_66 = arith.constant 0 : index
    %c0_67 = arith.constant 0 : index
    %75 = vector.load %arg3[%c1_65, %c0_66, %c0_67] : memref<3x128x128xbf16, #tpu.memory_space<vmem>>, vector<1x128x128xbf16>
    %76 = vector.shape_cast %75 : vector<1x128x128xbf16> to vector<128x128xbf16>
    %cst_68 = arith.constant dense<0.000000e+00> : vector<32x128xf32>
    %77 = tpu.matmul %74, %76, %cst_68 {dimension_numbers = #tpu.dot_dimension_numbers<[1], [0], [0], [1], [0, 0, 1, 1], [], []>} : vector<32x128xbf16>, vector<128x128xbf16>, vector<32x128xf32> -> vector<32x128xf32>
    %78 = arith.addf %71, %77 : vector<32x128xf32>
    %c0_69 = arith.constant 0 : index
    %c2_70 = arith.constant 2 : index
    %c0_71 = arith.constant 0 : index
    %79 = vector.load %arg7[%c0_69, %c2_70, %c0_71] : memref<2x18x128xf32, #tpu.memory_space<vmem>>, vector<2x16x128xf32>
    %80 = vector.shape_cast %79 : vector<2x16x128xf32> to vector<32x128xf32>
    %81 = arith.truncf %80 : vector<32x128xf32> to vector<32x128xbf16>
    %c2_72 = arith.constant 2 : index
    %c0_73 = arith.constant 0 : index
    %c0_74 = arith.constant 0 : index
    %82 = vector.load %arg3[%c2_72, %c0_73, %c0_74] : memref<3x128x128xbf16, #tpu.memory_space<vmem>>, vector<1x128x128xbf16>
    %83 = vector.shape_cast %82 : vector<1x128x128xbf16> to vector<128x128xbf16>
    %cst_75 = arith.constant dense<0.000000e+00> : vector<32x128xf32>
    %84 = tpu.matmul %81, %83, %cst_75 {dimension_numbers = #tpu.dot_dimension_numbers<[1], [0], [0], [1], [0, 0, 1, 1], [], []>} : vector<32x128xbf16>, vector<128x128xbf16>, vector<32x128xf32> -> vector<32x128xf32>
    %85 = arith.addf %78, %84 : vector<32x128xf32>
    %cst_76 = arith.constant dense<0.000000e+00> : vector<128xf32>
    %86 = vector.multi_reduction <add>, %85, %cst_76 [0] : vector<32x128xf32> to vector<128xf32>
    %87 = vector.shape_cast %86 : vector<128xf32> to vector<1x128xf32>
    %88 = arith.mulf %85, %85 : vector<32x128xf32>
    %cst_77 = arith.constant dense<0.000000e+00> : vector<128xf32>
    %89 = vector.multi_reduction <add>, %88, %cst_77 [0] : vector<32x128xf32> to vector<128xf32>
    %90 = vector.shape_cast %89 : vector<128xf32> to vector<1x128xf32>
    %cst_78 = arith.constant 3.125000e-02 : f32
    %91 = vector.broadcast %cst_78 : f32 to vector<1x128xf32>
    %92 = arith.mulf %87, %91 : vector<1x128xf32>
    %cst_79 = arith.constant 3.125000e-02 : f32
    %93 = vector.broadcast %cst_79 : f32 to vector<1x128xf32>
    %94 = arith.mulf %90, %93 : vector<1x128xf32>
    %95 = arith.mulf %92, %92 : vector<1x128xf32>
    %96 = arith.subf %94, %95 : vector<1x128xf32>
    %cst_80 = arith.constant 0.000000e+00 : f32
    %97 = vector.broadcast %cst_80 : f32 to vector<1x128xf32>
    %98 = arith.maximumf %96, %97 : vector<1x128xf32>
    %c0_81 = arith.constant 0 : index
    %c0_82 = arith.constant 0 : index
    %99 = vector.load %arg4[%c0_81, %c0_82] : memref<2x128xf32, #tpu.memory_space<vmem>>, vector<1x128xf32>
    %c1_83 = arith.constant 1 : index
    %c0_84 = arith.constant 0 : index
    %100 = vector.load %arg4[%c1_83, %c0_84] : memref<2x128xf32, #tpu.memory_space<vmem>>, vector<1x128xf32>
    %cst_85 = arith.constant 9.99999974E-6 : f32
    %101 = vector.broadcast %cst_85 : f32 to vector<1x128xf32>
    %102 = arith.addf %98, %101 : vector<1x128xf32>
    %103 = math.rsqrt %102 : vector<1x128xf32>
    %104 = arith.mulf %99, %103 : vector<1x128xf32>
    %105 = arith.mulf %92, %104 : vector<1x128xf32>
    %106 = arith.subf %100, %105 : vector<1x128xf32>
    %107 = vector.broadcast %104 : vector<1x128xf32> to vector<32x128xf32>
    %108 = arith.mulf %85, %107 : vector<32x128xf32>
    %109 = vector.broadcast %106 : vector<1x128xf32> to vector<32x128xf32>
    %110 = arith.addf %108, %109 : vector<32x128xf32>
    %cst_86 = arith.constant 0.000000e+00 : f32
    %111 = vector.broadcast %cst_86 : f32 to vector<32x128xf32>
    %112 = arith.cmpf oge, %110, %111 : vector<32x128xf32>
    %cst_87 = arith.constant 2.000000e-01 : f32
    %113 = vector.broadcast %cst_87 : f32 to vector<32x128xf32>
    %114 = arith.mulf %113, %110 : vector<32x128xf32>
    %115 = arith.select %112, %110, %114 : vector<32x128xi1>, vector<32x128xf32>
    %116 = vector.shape_cast %115 : vector<32x128xf32> to vector<2x16x128xf32>
    %c0_88 = arith.constant 0 : index
    %c0_89 = arith.constant 0 : index
    %c0_90 = arith.constant 0 : index
    %117 = vector.load %arg5[%c0_88, %c0_89, %c0_90] : memref<2x16x128xf32, #tpu.memory_space<vmem>>, vector<2x16x128xf32>
    tpu.vector_store %arg5[%c0_88, %c0_89, %c0_90], %116 {strides = array<i32>} : memref<2x16x128xf32, #tpu.memory_space<vmem>>, vector<2x16x128xf32>,
    return
  }
}

</mosaic_0001>

<llo_original>
// kernel: tpu_custom_call.1
$region0: #{tpu_custom_call.1}
  #allocation0 [shape = 'u32[]', space=smem, size = 0x4, offset = 0x4, fixed_abs, tag = 'smem constant byte address 0x4 - core index']
  #allocation1 [shape = 'u32[144,128]{1,0:T(1,128)}', space=vmem, size = 0x12000, scoped, tag = 'internal scratch']
  #allocation2 [shape = 'f32[2,18,4]{2,1,0:T(8,128)}', space=vmem, size = 0x6000, scoped, tag = 'scratch operand']
  #allocation3 [shape = 'f32[2,18,128]{2,1,0:T(8,128)}', space=vmem, size = 0x6000, scoped, tag = 'scratch operand']
  %s0 = inlined_call_operand.vmem [shape: f32[2,16,4], index: 0, kind: input, shape index: {}]
  %s1 = inlined_call_operand.vmem [shape: bf16[3,4,128], index: 1, kind: input, shape index: {}]
  %s2 = inlined_call_operand.vmem [shape: f32[2,128], index: 2, kind: input, shape index: {}]
  %s3 = inlined_call_operand.hbm [shape: bf16[3,128,128], index: 3, kind: input, shape index: {}]
  %s4 = inlined_call_operand.vmem [shape: f32[2,128], index: 4, kind: input, shape index: {}]
  %s5 = inlined_call_operand.hbm [shape: f32[2,16,128], index: 5, kind: output, shape index: {}]
  %s6 = sld [smem:[#allocation0]]
  $region34: #{tpu_custom_call.1} parent=0
    _
  %s8 = ssub.s32 1, %s6
  %s9 = scalar_select 0, %s8, %s6
  $region1: #{tpu_custom_call.1} parent=0
    #allocation4 [shape = 'u8[98304]{0}', space=vmem, size = 0x18000, scoped, tag = 'input window, operand 3, single buffered']
    #allocation5 [shape = 's32[1]{0}', space=sflag, size = 0x4, scoped, tag = 'scoped memory for tpu_custom_call.1']
    #allocation6 [shape = 's32[1]{0}', space=sflag, size = 0x4, scoped, tag = 'scoped memory for tpu_custom_call.1']
    #allocation7 [shape = 'u8[16384]{0}', space=vmem, size = 0x4000, scoped, tag = 'output window, operand 0, single buffered']
    %10 = vsyncpa [#allocation5], 0
    %11 = vsyncpa [#allocation6], 0
    // Predicated region
    $region2: #{tpu_custom_call.1} parent=1 // pred_check
      _
    $region3: #{tpu_custom_call.1} parent=1 // pred_check_branch
      %13 = sbr.rel (0) target = $region5
    $region4: #{tpu_custom_call.1} parent=1 // pred_region
      _
    $region5: #{tpu_custom_call.1} parent=1 // pred_fallthru
      _
    // Predicated region
    $region6: #{tpu_custom_call.1} parent=1 // pred_check
      _
    $region7: #{tpu_custom_call.1} parent=1 // pred_check_branch
      %15 = sbr.rel (0) target = $region9
    $region8: #{tpu_custom_call.1} parent=1 // pred_region
      _
    $region9: #{tpu_custom_call.1} parent=1 // pred_fallthru
      _
    // Predicated region
    $region10: #{tpu_custom_call.1} parent=1 // pred_check
      _
    $region11: #{tpu_custom_call.1} parent=1 // pred_check_branch
      %17 = sbr.rel (0) target = $region13
    $region12: #{tpu_custom_call.1} parent=1 // pred_region
      _
    $region13: #{tpu_custom_call.1} parent=1 // pred_fallthru
      _
    // Predicated region
    $region14: #{tpu_custom_call.1} parent=1 // pred_check
      _
    $region15: #{tpu_custom_call.1} parent=1 // pred_check_branch
      %19 = sbr.rel (0) target = $region17
    $region16: #{tpu_custom_call.1} parent=1 // pred_region
      %s21 = ssub.s32 3072, 3072
      %22 = vsyncadd [#allocation5], %s21
      %s23 = sshll.u32 [#allocation4], 4
      %s24 = int_to_ptr.vmem [resolvable:$true] %s23
      %29 = dma.hbm_to_vmem [thread:$0]  %s3, 3072, %s24, [#allocation5], 64, 64, 4
    $region17: #{tpu_custom_call.1} parent=1 // pred_fallthru
      _
    // Predicated region
    $region18: #{tpu_custom_call.1} parent=1 // pred_check
      _
    $region19: #{tpu_custom_call.1} parent=1 // pred_check_branch
      %31 = sbr.rel (0) target = $region21
    $region20: #{tpu_custom_call.1} parent=1 // pred_region
      _
    $region21: #{tpu_custom_call.1} parent=1 // pred_fallthru
      _
    // Predicated region
    $region22: #{tpu_custom_call.1} parent=1 // pred_check
      _
    $region23: #{tpu_custom_call.1} parent=1 // pred_check_branch
      %33 = sbr.rel (0) target = $region25
    $region24: #{tpu_custom_call.1} parent=1 // pred_region
      %34 = dma.done [#allocation5], 3072
    $region25: #{tpu_custom_call.1} parent=1 // pred_fallthru
      _
    %vm36 = vcmask 24576
    %37 = vst.msk [vmem:[#allocation2] sm:$0x1] %vm36, 0.0
    %38 = vst.msk [vmem:[#allocation2 + $0x18] sm:$0x1] %vm36, 0.0
    %39 = vst.msk [vmem:[#allocation2 + $0x11] sm:$0x1] %vm36, 0.0
    %40 = vst.msk [vmem:[#allocation2 + $0x29] sm:$0x1] %vm36, 0.0
    %v41 = vld [vmem:[%s0] sm:$0xff]
    %v42 = vld [vmem:[%s0 + $0x8] sm:$0xff]
    %v43 = vld [vmem:[%s0 + $0x10] sm:$0xff]
    %v44 = vld [vmem:[%s0 + $0x18] sm:$0xff]
    %vm45 = vcmask 31744
    %46 = vst.msk [vmem:[#allocation2 + $0x1] sm:$0xff] %vm45, %v41
    %47 = vst.msk [vmem:[#allocation2 + $0x9] sm:$0xff] %vm45, %v42
    %48 = vst.msk [vmem:[#allocation2 + $0x19] sm:$0xff] %vm45, %v43
    %49 = vst.msk [vmem:[#allocation2 + $0x21] sm:$0xff] %vm45, %v44
    %v50 = vld [vmem:[#allocation2] sm:$0xff]
    %v51 = vld [vmem:[#allocation2 + $0x8] sm:$0xff]
    %v52 = vld [vmem:[#allocation2 + $0x18] sm:$0xff]
    %v53 = vld [vmem:[#allocation2 + $0x20] sm:$0xff]
    %v54 = vpack.c.bf16 %v51, %v50
    %v55 = vpack.c.bf16 %v53, %v52
    %v56 = vld [vmem:[%s1] sm:$0x3]
    %v57 = vld [vmem:[#allocation2 + $0x1] sm:$0xff]
    %v58 = vld [vmem:[#allocation2 + $0x9] sm:$0xff]
    %v59 = vld [vmem:[#allocation2 + $0x19] sm:$0xff]
    %v60 = vld [vmem:[#allocation2 + $0x21] sm:$0xff]
    %v61 = vpack.c.bf16 %v58, %v57
    %v62 = vpack.c.bf16 %v60, %v59
    %s63 = scalar_lea.vmem %s1, 2
    %v64 = vld [vmem:[%s63] sm:$0x3]
    %v66 = vsel %vm45, %v61, 0
    %v69 = vsel %vm45, %v62, 0
    %vm71 = vcmask 1041408
    %v73 = vsel %vm71, %v64, 0
    %75 = vmatprep.subr.bf16.mxu0 0
    %76 = vmatpush1.bf16.msra.mxu0 %v73
    %77 = vmatprep.subr.bf16.mxu0 0
    %78 = vmatpush1.bf16.msra.mxu0 0
    %79 = vmatprep.subr.bf16.mxu0 0
    %80 = vmatpush1.bf16.msra.mxu0 0
    %81 = vmatprep.subr.bf16.mxu0 0
    %82 = vmatpush1.bf16.msra.mxu0 0
    %83 = vmatprep.subr.bf16.mxu0 0
    %84 = vmatpush1.bf16.msra.mxu0 0
    %85 = vmatprep.subr.bf16.mxu0 0
    %86 = vmatpush1.bf16.msra.mxu0 0
    %87 = vmatprep.subr.bf16.mxu0 0
    %88 = vmatpush1.bf16.msra.mxu0 0
    %89 = vmatprep.subr.bf16.mxu0 0
    %90 = vmatpush1.bf16.msra.mxu0 0
    %91 = vmatprep.subr.bf16.mxu0 0
    %92 = vmatpush1.bf16.msra.mxu0 0
    %93 = vmatprep.subr.bf16.mxu0 0
    %94 = vmatpush1.bf16.msra.mxu0 0
    %95 = vmatprep.subr.bf16.mxu0 0
    %96 = vmatpush1.bf16.msra.mxu0 0
    %97 = vmatprep.subr.bf16.mxu0 0
    %98 = vmatpush1.bf16.msra.mxu0 0
    %99 = vmatprep.subr.bf16.mxu0 0
    %100 = vmatpush1.bf16.msra.mxu0 0
    %101 = vmatprep.subr.bf16.mxu0 0
    %102 = vmatpush1.bf16.msra.mxu0 0
    %103 = vmatprep.subr.bf16.mxu0 0
    %104 = vmatpush1.bf16.msra.mxu0 0
    %105 = vmatprep.subr.bf16.mxu0 0
    %106 = vmatpush1.bf16.msra.mxu0 0
    %107 = vmatprep.mubr.bf16.mxu0 0
    %108 = vmatmul.mubr.bf16.gmra.mrb[0].mxu0 %v66
    %v109 = vpop.f32.mrb[0].mxu0
    %v110 = vadd.f32 0.0, %v109
    %v111 = vpop.f32.mrb[0].mxu0
    %v112 = vpop.f32.mrb[0].mxu0
    %v113 = vadd.f32 0.0, %v112
    %v114 = vpop.f32.mrb[0].mxu0
    %115 = vmatprep.mubr.bf16.mxu0 0
    %116 = vmatmul.mubr.bf16.gmra.mrb[0].mxu0 %v69
    %v117 = vpop.f32.mrb[0].mxu0
    %v118 = vadd.f32 0.0, %v117
    %v119 = vpop.f32.mrb[0].mxu0
    %v120 = vpop.f32.mrb[0].mxu0
    %v121 = vadd.f32 0.0, %v120
    %v122 = vpop.f32.mrb[0].mxu0
    %123 = vdwg.mxu0
    %v125 = vsel %vm45, %v54, 0
    %v128 = vsel %vm45, %v55, 0
    %v131 = vsel %vm71, %v56, 0
    %133 = vmatprep.subr.bf16.mxu0 0
    %134 = vmatpush1.bf16.msra.mxu0 %v131
    %135 = vmatprep.subr.bf16.mxu0 0
    %136 = vmatpush1.bf16.msra.mxu0 0
    %137 = vmatprep.subr.bf16.mxu0 0
    %138 = vmatpush1.bf16.msra.mxu0 0
    %139 = vmatprep.subr.bf16.mxu0 0
    %140 = vmatpush1.bf16.msra.mxu0 0
    %141 = vmatprep.subr.bf16.mxu0 0
    %142 = vmatpush1.bf16.msra.mxu0 0
    %143 = vmatprep.subr.bf16.mxu0 0
    %144 = vmatpush1.bf16.msra.mxu0 0
    %145 = vmatprep.subr.bf16.mxu0 0
    %146 = vmatpush1.bf16.msra.mxu0 0
    %147 = vmatprep.subr.bf16.mxu0 0
    %148 = vmatpush1.bf16.msra.mxu0 0
    %149 = vmatprep.subr.bf16.mxu0 0
    %150 = vmatpush1.bf16.msra.mxu0 0
    %151 = vmatprep.subr.bf16.mxu0 0
    %152 = vmatpush1.bf16.msra.mxu0 0
    %153 = vmatprep.subr.bf16.mxu0 0
    %154 = vmatpush1.bf16.msra.mxu0 0
    %155 = vmatprep.subr.bf16.mxu0 0
    %156 = vmatpush1.bf16.msra.mxu0 0
    %157 = vmatprep.subr.bf16.mxu0 0
    %158 = vmatpush1.bf16.msra.mxu0 0
    %159 = vmatprep.subr.bf16.mxu0 0
    %160 = vmatpush1.bf16.msra.mxu0 0
    %161 = vmatprep.subr.bf16.mxu0 0
    %162 = vmatpush1.bf16.msra.mxu0 0
    %163 = vmatprep.subr.bf16.mxu0 0
    %164 = vmatpush1.bf16.msra.mxu0 0
    %165 = vmatprep.mubr.bf16.mxu0 0
    %166 = vmatmul.mubr.bf16.gmra.mrb[0].mxu0 %v125
    %v167 = vpop.f32.mrb[0].mxu0
    %v168 = vadd.f32 %v110, %v167
    %v169 = vpop.f32.mrb[0].mxu0
    %v170 = vpop.f32.mrb[0].mxu0
    %v171 = vadd.f32 %v113, %v170
    %v172 = vpop.f32.mrb[0].mxu0
    %173 = vmatprep.mubr.bf16.mxu0 0
    %174 = vmatmul.mubr.bf16.gmra.mrb[0].mxu0 %v128
    %v175 = vpop.f32.mrb[0].mxu0
    %v176 = vadd.f32 %v118, %v175
    %v177 = vpop.f32.mrb[0].mxu0
    %v178 = vpop.f32.mrb[0].mxu0
    %v179 = vadd.f32 %v121, %v178
    %v180 = vpop.f32.mrb[0].mxu0
    %181 = vdwg.mxu0
    %v182 = vld [vmem:[#allocation2 + $0x2] sm:$0xff]
    %v183 = vld [vmem:[#allocation2 + $0xa] sm:$0xff]
    %v184 = vld [vmem:[#allocation2 + $0x1a] sm:$0xff]
    %v185 = vld [vmem:[#allocation2 + $0x22] sm:$0xff]
    %v186 = vpack.c.bf16 %v183, %v182
    %v187 = vpack.c.bf16 %v185, %v184
    %s188 = scalar_lea.vmem %s1, 4
    %v189 = vld [vmem:[%s188] sm:$0x3]
    %v191 = vsel %vm45, %v186, 0
    %v194 = vsel %vm45, %v187, 0
    %v197 = vsel %vm71, %v189, 0
    %199 = vmatprep.subr.bf16.mxu0 0
    %200 = vmatpush1.bf16.msra.mxu0 %v197
    %201 = vmatprep.subr.bf16.mxu0 0
    %202 = vmatpush1.bf16.msra.mxu0 0
    %203 = vmatprep.subr.bf16.mxu0 0
    %204 = vmatpush1.bf16.msra.mxu0 0
    %205 = vmatprep.subr.bf16.mxu0 0
    %206 = vmatpush1.bf16.msra.mxu0 0
    %207 = vmatprep.subr.bf16.mxu0 0
    %208 = vmatpush1.bf16.msra.mxu0 0
    %209 = vmatprep.subr.bf16.mxu0 0
    %210 = vmatpush1.bf16.msra.mxu0 0
    %211 = vmatprep.subr.bf16.mxu0 0
    %212 = vmatpush1.bf16.msra.mxu0 0
    %213 = vmatprep.subr.bf16.mxu0 0
    %214 = vmatpush1.bf16.msra.mxu0 0
    %215 = vmatprep.subr.bf16.mxu0 0
    %216 = vmatpush1.bf16.msra.mxu0 0
    %217 = vmatprep.subr.bf16.mxu0 0
    %218 = vmatpush1.bf16.msra.mxu0 0
    %219 = vmatprep.subr.bf16.mxu0 0
    %220 = vmatpush1.bf16.msra.mxu0 0
    %221 = vmatprep.subr.bf16.mxu0 0
    %222 = vmatpush1.bf16.msra.mxu0 0
    %223 = vmatprep.subr.bf16.mxu0 0
    %224 = vmatpush1.bf16.msra.mxu0 0
    %225 = vmatprep.subr.bf16.mxu0 0
    %226 = vmatpush1.bf16.msra.mxu0 0
    %227 = vmatprep.subr.bf16.mxu0 0
    %228 = vmatpush1.bf16.msra.mxu0 0
    %229 = vmatprep.subr.bf16.mxu0 0
    %230 = vmatpush1.bf16.msra.mxu0 0
    %231 = vmatprep.mubr.bf16.mxu0 0
    %232 = vmatmul.mubr.bf16.gmra.mrb[0].mxu0 %v191
    %v233 = vpop.f32.mrb[0].mxu0
    %v234 = vadd.f32 0.0, %v233
    %v235 = vpop.f32.mrb[0].mxu0
    %v236 = vpop.f32.mrb[0].mxu0
    %v237 = vadd.f32 0.0, %v236
    %v238 = vpop.f32.mrb[0].mxu0
    %239 = vmatprep.mubr.bf16.mxu0 0
    %240 = vmatmul.mubr.bf16.gmra.mrb[0].mxu0 %v194
    %v241 = vpop.f32.mrb[0].mxu0
    %v242 = vadd.f32 0.0, %v241
    %v243 = vpop.f32.mrb[0].mxu0
    %v244 = vpop.f32.mrb[0].mxu0
    %v245 = vadd.f32 0.0, %v244
    %v246 = vpop.f32.mrb[0].mxu0
    %247 = vdwg.mxu0
    %v248 = vadd.f32 %v168, %v234
    %v249 = vadd.f32 %v171, %v237
    %v250 = vadd.f32 %v176, %v242
    %v251 = vadd.f32 %v179, %v245
    %v252 = vadd.f32 %v248, %v249
    %v253 = vadd.f32 %v252, %v250
    %v254 = vadd.f32 %v253, %v251
    %v255 = vrot.slane %v254, 4
    %v256 = vadd.f32 %v254, %v255
    %v257 = vrot.slane %v256, 2
    %v258 = vadd.f32 %v256, %v257
    %v259 = vrot.slane %v258, 1
    %v260 = vadd.f32 %v258, %v259
    %v261 = vmul.f32 %v248, %v248
    %v262 = vmul.f32 %v249, %v249
    %v263 = vmul.f32 %v250, %v250
    %v264 = vmul.f32 %v251, %v251
    %v265 = vadd.f32 %v261, %v262
    %v266 = vadd.f32 %v265, %v263
    %v267 = vadd.f32 %v266, %v264
    %v268 = vrot.slane %v267, 4
    %v269 = vadd.f32 %v267, %v268
    %v270 = vrot.slane %v269, 2
    %v271 = vadd.f32 %v269, %v270
    %v272 = vrot.slane %v271, 1
    %v273 = vadd.f32 %v271, %v272
    %v274 = vmul.f32 %v260, 0.03125
    %v275 = vmul.f32 %v273, 0.03125
    %v276 = vmul.f32 %v274, %v274
    %v277 = vsub.f32 %v275, %v276
    %v278 = vmax.f32 %v277, 0.0
    %v279 = vld [vmem:[%s2] sm:$0x1]
    %v280 = vld [vmem:[%s2 + $0x1] sm:$0x1]
    %v281 = vadd.f32 %v278, 1e-05
    %v282 = vrsqrt.pop %v281
    %v283 = vmul.f32 %v279, %v282
    %v284 = vmul.f32 %v274, %v283
    %v285 = vsub.f32 %v280, %v284
    %v286 = vlaneseq
    %v287 = vshrl.u32 %v286, 7
    %v288 = vsub.s32 0, %v287
    %v289 = vrot.slane %v283, %v288
    %v290 = vmul.f32 %v248, %v289
    %v291 = vmul.f32 %v249, %v289
    %v292 = vmul.f32 %v250, %v289
    %v293 = vmul.f32 %v251, %v289
    %v294 = vlaneseq
    %v295 = vshrl.u32 %v294, 7
    %v296 = vsub.s32 0, %v295
    %v297 = vrot.slane %v285, %v296
    %v298 = vadd.f32 %v290, %v297
    %v299 = vadd.f32 %v291, %v297
    %v300 = vadd.f32 %v292, %v297
    %v301 = vadd.f32 %v293, %v297
    %vm302 = vcmp.ge.f32.partialorder %v298, 0.0
    %vm303 = vcmp.ge.f32.partialorder %v299, 0.0
    %vm304 = vcmp.ge.f32.partialorder %v300, 0.0
    %vm305 = vcmp.ge.f32.partialorder %v301, 0.0
    %v306 = vmul.f32 %v298, 0.2
    %v307 = vmul.f32 %v299, 0.2
    %v308 = vmul.f32 %v300, 0.2
    %v309 = vmul.f32 %v301, 0.2
    %v310 = vsel %vm302, %v298, %v306
    %v311 = vsel %vm303, %v299, %v307
    %v312 = vsel %vm304, %v300, %v308
    %v313 = vsel %vm305, %v301, %v309
    %314 = vst [vmem:[#allocation3] sm:$0x1] 0.0
    %315 = vst [vmem:[#allocation3 + $0x18] sm:$0x1] 0.0
    %316 = vst [vmem:[#allocation3 + $0x11] sm:$0x1] 0.0
    %317 = vst [vmem:[#allocation3 + $0x29] sm:$0x1] 0.0
    %318 = vst [vmem:[#allocation3 + $0x1] sm:$0xff] %v310
    %319 = vst [vmem:[#allocation3 + $0x9] sm:$0xff] %v311
    %320 = vst [vmem:[#allocation3 + $0x19] sm:$0xff] %v312
    %321 = vst [vmem:[#allocation3 + $0x21] sm:$0xff] %v313
    %v322 = vld [vmem:[#allocation3] sm:$0xff]
    %v323 = vld [vmem:[#allocation3 + $0x8] sm:$0xff]
    %v324 = vld [vmem:[#allocation3 + $0x18] sm:$0xff]
    %v325 = vld [vmem:[#allocation3 + $0x20] sm:$0xff]
    %v326 = vpack.c.bf16 %v323, %v322
    %v327 = vpack.c.bf16 %v325, %v324
    %v328 = vld [vmem:[#allocation4] sm:$0xf]
    %v329 = vld [vmem:[#allocation4 + $0x4] sm:$0xf]
    %v330 = vld [vmem:[#allocation4 + $0x8] sm:$0xf]
    %v331 = vld [vmem:[#allocation4 + $0xc] sm:$0xf]
    %v332 = vld [vmem:[#allocation4 + $0x10] sm:$0xf]
    %v333 = vld [vmem:[#allocation4 + $0x14] sm:$0xf]
    %v334 = vld [vmem:[#allocation4 + $0x18] sm:$0xf]
    %v335 = vld [vmem:[#allocation4 + $0x1c] sm:$0xf]
    %v336 = vld [vmem:[#allocation4 + $0x20] sm:$0xf]
    %v337 = vld [vmem:[#allocation4 + $0x24] sm:$0xf]
    %v338 = vld [vmem:[#allocation4 + $0x28] sm:$0xf]
    %v339 = vld [vmem:[#allocation4 + $0x2c] sm:$0xf]
    %v340 = vld [vmem:[#allocation4 + $0x30] sm:$0xf]
    %v341 = vld [vmem:[#allocation4 + $0x34] sm:$0xf]
    %v342 = vld [vmem:[#allocation4 + $0x38] sm:$0xf]
    %v343 = vld [vmem:[#allocation4 + $0x3c] sm:$0xf]
    %v344 = vld [vmem:[#allocation3 + $0x1] sm:$0xff]
    %v345 = vld [vmem:[#allocation3 + $0x9] sm:$0xff]
    %v346 = vld [vmem:[#allocation3 + $0x19] sm:$0xff]
    %v347 = vld [vmem:[#allocation3 + $0x21] sm:$0xff]
    %v348 = vpack.c.bf16 %v345, %v344
    %v349 = vpack.c.bf16 %v347, %v346
    %s350 = scalar_lea.vmem [#allocation4], 64
    %v351 = vld [vmem:[%s350] sm:$0xf]
    %v352 = vld [vmem:[%s350 + $0x4] sm:$0xf]
    %v353 = vld [vmem:[%s350 + $0x8] sm:$0xf]
    %v354 = vld [vmem:[%s350 + $0xc] sm:$0xf]
    %v355 = vld [vmem:[%s350 + $0x10] sm:$0xf]
    %v356 = vld [vmem:[%s350 + $0x14] sm:$0xf]
    %v357 = vld [vmem:[%s350 + $0x18] sm:$0xf]
    %v358 = vld [vmem:[%s350 + $0x1c] sm:$0xf]
    %v359 = vld [vmem:[%s350 + $0x20] sm:$0xf]
    %v360 = vld [vmem:[%s350 + $0x24] sm:$0xf]
    %v361 = vld [vmem:[%s350 + $0x28] sm:$0xf]
    %v362 = vld [vmem:[%s350 + $0x2c] sm:$0xf]
    %v363 = vld [vmem:[%s350 + $0x30] sm:$0xf]
    %v364 = vld [vmem:[%s350 + $0x34] sm:$0xf]
    %v365 = vld [vmem:[%s350 + $0x38] sm:$0xf]
    %v366 = vld [vmem:[%s350 + $0x3c] sm:$0xf]
    %v383 = vunpack.c.l.b16 %v351
    %v384 = vunpack.c.l.b16 %v352
    %v385 = vunpack.c.l.b16 %v353
    %v386 = vunpack.c.l.b16 %v354
    %v387 = vunpack.c.l.b16 %v355
    %v388 = vunpack.c.l.b16 %v356
    %v389 = vunpack.c.l.b16 %v357
    %v390 = vunpack.c.l.b16 %v358
    %v391 = vunpack.c.l.b16 %v359
    %v392 = vunpack.c.l.b16 %v360
    %v393 = vunpack.c.l.b16 %v361
    %v394 = vunpack.c.l.b16 %v362
    %v395 = vunpack.c.l.b16 %v363
    %v396 = vunpack.c.l.b16 %v364
    %v397 = vunpack.c.l.b16 %v365
    %v398 = vunpack.c.l.b16 %v366
    %v399 = vpack.c.b16 %v384, %v383
    %v400 = vpack.c.b16 %v386, %v385
    %v401 = vpack.c.b16 %v388, %v387
    %v402 = vpack.c.b16 %v390, %v389
    %v403 = vpack.c.b16 %v392, %v391
    %v404 = vpack.c.b16 %v394, %v393
    %v405 = vpack.c.b16 %v396, %v395
    %v406 = vpack.c.b16 %v398, %v397
    %415 = vmatprep.subr.bf16.mxu0 0
    %416 = vmatpush1.bf16.msra.mxu0 %v399
    %417 = vmatprep.subr.bf16.mxu0 0
    %418 = vmatpush1.bf16.msra.mxu0 %v400
    %419 = vmatprep.subr.bf16.mxu0 0
    %420 = vmatpush1.bf16.msra.mxu0 %v401
    %421 = vmatprep.subr.bf16.mxu0 0
    %422 = vmatpush1.bf16.msra.mxu0 %v402
    %423 = vmatprep.subr.bf16.mxu0 0
    %424 = vmatpush1.bf16.msra.mxu0 %v403
    %425 = vmatprep.subr.bf16.mxu0 0
    %426 = vmatpush1.bf16.msra.mxu0 %v404
    %427 = vmatprep.subr.bf16.mxu0 0
    %428 = vmatpush1.bf16.msra.mxu0 %v405
    %429 = vmatprep.subr.bf16.mxu0 0
    %430 = vmatpush1.bf16.msra.mxu0 %v406
    %431 = vmatprep.subr.bf16.mxu0 0
    %432 = vmatpush1.bf16.msra.mxu0 0
    %433 = vmatprep.subr.bf16.mxu0 0
    %434 = vmatpush1.bf16.msra.mxu0 0
    %435 = vmatprep.subr.bf16.mxu0 0
    %436 = vmatpush1.bf16.msra.mxu0 0
    %437 = vmatprep.subr.bf16.mxu0 0
    %438 = vmatpush1.bf16.msra.mxu0 0
    %439 = vmatprep.subr.bf16.mxu0 0
    %440 = vmatpush1.bf16.msra.mxu0 0
    %441 = vmatprep.subr.bf16.mxu0 0
    %442 = vmatpush1.bf16.msra.mxu0 0
    %443 = vmatprep.subr.bf16.mxu0 0
    %444 = vmatpush1.bf16.msra.mxu0 0
    %445 = vmatprep.subr.bf16.mxu0 0
    %446 = vmatpush1.bf16.msra.mxu0 0
    %447 = vmatprep.mubr.bf16.mxu0 0
    %448 = vmatmul.mubr.bf16.gmra.mrb[0].mxu0 %v348
    %v449 = vpop.f32.mrb[0].mxu0
    %v450 = vadd.f32 0.0, %v449
    %v451 = vpop.f32.mrb[0].mxu0
    %v452 = vpop.f32.mrb[0].mxu0
    %v453 = vadd.f32 0.0, %v452
    %v454 = vpop.f32.mrb[0].mxu0
    %455 = vmatprep.mubr.bf16.mxu0 0
    %456 = vmatmul.mubr.bf16.gmra.mrb[0].mxu0 %v349
    %v457 = vpop.f32.mrb[0].mxu0
    %v458 = vadd.f32 0.0, %v457
    %v459 = vpop.f32.mrb[0].mxu0
    %v460 = vpop.f32.mrb[0].mxu0
    %v461 = vadd.f32 0.0, %v460
    %v462 = vpop.f32.mrb[0].mxu0
    %463 = vdwg.mxu0
    %v480 = vunpack.c.l.b16 %v328
    %v481 = vunpack.c.l.b16 %v329
    %v482 = vunpack.c.l.b16 %v330
    %v483 = vunpack.c.l.b16 %v331
    %v484 = vunpack.c.l.b16 %v332
    %v485 = vunpack.c.l.b16 %v333
    %v486 = vunpack.c.l.b16 %v334
    %v487 = vunpack.c.l.b16 %v335
    %v488 = vunpack.c.l.b16 %v336
    %v489 = vunpack.c.l.b16 %v337
    %v490 = vunpack.c.l.b16 %v338
    %v491 = vunpack.c.l.b16 %v339
    %v492 = vunpack.c.l.b16 %v340
    %v493 = vunpack.c.l.b16 %v341
    %v494 = vunpack.c.l.b16 %v342
    %v495 = vunpack.c.l.b16 %v343
    %v496 = vpack.c.b16 %v481, %v480
    %v497 = vpack.c.b16 %v483, %v482
    %v498 = vpack.c.b16 %v485, %v484
    %v499 = vpack.c.b16 %v487, %v486
    %v500 = vpack.c.b16 %v489, %v488
    %v501 = vpack.c.b16 %v491, %v490
    %v502 = vpack.c.b16 %v493, %v492
    %v503 = vpack.c.b16 %v495, %v494
    %512 = vmatprep.subr.bf16.mxu0 0
    %513 = vmatpush1.bf16.msra.mxu0 %v496
    %514 = vmatprep.subr.bf16.mxu0 0
    %515 = vmatpush1.bf16.msra.mxu0 %v497
    %516 = vmatprep.subr.bf16.mxu0 0
    %517 = vmatpush1.bf16.msra.mxu0 %v498
    %518 = vmatprep.subr.bf16.mxu0 0
    %519 = vmatpush1.bf16.msra.mxu0 %v499
    %520 = vmatprep.subr.bf16.mxu0 0
    %521 = vmatpush1.bf16.msra.mxu0 %v500
    %522 = vmatprep.subr.bf16.mxu0 0
    %523 = vmatpush1.bf16.msra.mxu0 %v501
    %524 = vmatprep.subr.bf16.mxu0 0
    %525 = vmatpush1.bf16.msra.mxu0 %v502
    %526 = vmatprep.subr.bf16.mxu0 0
    %527 = vmatpush1.bf16.msra.mxu0 %v503
    %528 = vmatprep.subr.bf16.mxu0 0
    %529 = vmatpush1.bf16.msra.mxu0 0
    %530 = vmatprep.subr.bf16.mxu0 0
    %531 = vmatpush1.bf16.msra.mxu0 0
    %532 = vmatprep.subr.bf16.mxu0 0
    %533 = vmatpush1.bf16.msra.mxu0 0
    %534 = vmatprep.subr.bf16.mxu0 0
    %535 = vmatpush1.bf16.msra.mxu0 0
    %536 = vmatprep.subr.bf16.mxu0 0
    %537 = vmatpush1.bf16.msra.mxu0 0
    %538 = vmatprep.subr.bf16.mxu0 0
    %539 = vmatpush1.bf16.msra.mxu0 0
    %540 = vmatprep.subr.bf16.mxu0 0
    %541 = vmatpush1.bf16.msra.mxu0 0
    %542 = vmatprep.subr.bf16.mxu0 0
    %543 = vmatpush1.bf16.msra.mxu0 0
    %544 = vmatprep.mubr.bf16.mxu0 0
    %545 = vmatmul.mubr.bf16.gmra.mrb[0].mxu0 %v326
    %v546 = vpop.f32.mrb[0].mxu0
    %v547 = vadd.f32 %v450, %v546
    %v548 = vpop.f32.mrb[0].mxu0
    %v549 = vpop.f32.mrb[0].mxu0
    %v550 = vadd.f32 %v453, %v549
    %v551 = vpop.f32.mrb[0].mxu0
    %552 = vmatprep.mubr.bf16.mxu0 0
    %553 = vmatmul.mubr.bf16.gmra.mrb[0].mxu0 %v327
    %v554 = vpop.f32.mrb[0].mxu0
    %v555 = vadd.f32 %v458, %v554
    %v556 = vpop.f32.mrb[0].mxu0
    %v557 = vpop.f32.mrb[0].mxu0
    %v558 = vadd.f32 %v461, %v557
    %v559 = vpop.f32.mrb[0].mxu0
    %560 = vdwg.mxu0
    %v561 = vld [vmem:[#allocation3 + $0x2] sm:$0xff]
    %v562 = vld [vmem:[#allocation3 + $0xa] sm:$0xff]
    %v563 = vld [vmem:[#allocation3 + $0x1a] sm:$0xff]
    %v564 = vld [vmem:[#allocation3 + $0x22] sm:$0xff]
    %v565 = vpack.c.bf16 %v562, %v561
    %v566 = vpack.c.bf16 %v564, %v563
    %s567 = scalar_lea.vmem [#allocation4], 128
    %v568 = vld [vmem:[%s567] sm:$0xf]
    %v569 = vld [vmem:[%s567 + $0x4] sm:$0xf]
    %v570 = vld [vmem:[%s567 + $0x8] sm:$0xf]
    %v571 = vld [vmem:[%s567 + $0xc] sm:$0xf]
    %v572 = vld [vmem:[%s567 + $0x10] sm:$0xf]
    %v573 = vld [vmem:[%s567 + $0x14] sm:$0xf]
    %v574 = vld [vmem:[%s567 + $0x18] sm:$0xf]
    %v575 = vld [vmem:[%s567 + $0x1c] sm:$0xf]
    %v576 = vld [vmem:[%s567 + $0x20] sm:$0xf]
    %v577 = vld [vmem:[%s567 + $0x24] sm:$0xf]
    %v578 = vld [vmem:[%s567 + $0x28] sm:$0xf]
    %v579 = vld [vmem:[%s567 + $0x2c] sm:$0xf]
    %v580 = vld [vmem:[%s567 + $0x30] sm:$0xf]
    %v581 = vld [vmem:[%s567 + $0x34] sm:$0xf]
    %v582 = vld [vmem:[%s567 + $0x38] sm:$0xf]
    %v583 = vld [vmem:[%s567 + $0x3c] sm:$0xf]
    %v600 = vunpack.c.l.b16 %v568
    %v601 = vunpack.c.l.b16 %v569
    %v602 = vunpack.c.l.b16 %v570
    %v603 = vunpack.c.l.b16 %v571
    %v604 = vunpack.c.l.b16 %v572
    %v605 = vunpack.c.l.b16 %v573
    %v606 = vunpack.c.l.b16 %v574
    %v607 = vunpack.c.l.b16 %v575
    %v608 = vunpack.c.l.b16 %v576
    %v609 = vunpack.c.l.b16 %v577
    %v610 = vunpack.c.l.b16 %v578
    %v611 = vunpack.c.l.b16 %v579
    %v612 = vunpack.c.l.b16 %v580
    %v613 = vunpack.c.l.b16 %v581
    %v614 = vunpack.c.l.b16 %v582
    %v615 = vunpack.c.l.b16 %v583
    %v616 = vpack.c.b16 %v601, %v600
    %v617 = vpack.c.b16 %v603, %v602
    %v618 = vpack.c.b16 %v605, %v604
    %v619 = vpack.c.b16 %v607, %v606
    %v620 = vpack.c.b16 %v609, %v608
    %v621 = vpack.c.b16 %v611, %v610
    %v622 = vpack.c.b16 %v613, %v612
    %v623 = vpack.c.b16 %v615, %v614
    %632 = vmatprep.subr.bf16.mxu0 0
    %633 = vmatpush1.bf16.msra.mxu0 %v616
    %634 = vmatprep.subr.bf16.mxu0 0
    %635 = vmatpush1.bf16.msra.mxu0 %v617
    %636 = vmatprep.subr.bf16.mxu0 0
    %637 = vmatpush1.bf16.msra.mxu0 %v618
    %638 = vmatprep.subr.bf16.mxu0 0
    %639 = vmatpush1.bf16.msra.mxu0 %v619
    %640 = vmatprep.subr.bf16.mxu0 0
    %641 = vmatpush1.bf16.msra.mxu0 %v620
    %642 = vmatprep.subr.bf16.mxu0 0
    %643 = vmatpush1.bf16.msra.mxu0 %v621
    %644 = vmatprep.subr.bf16.mxu0 0
    %645 = vmatpush1.bf16.msra.mxu0 %v622
    %646 = vmatprep.subr.bf16.mxu0 0
    %647 = vmatpush1.bf16.msra.mxu0 %v623
    %648 = vmatprep.subr.bf16.mxu0 0
    %649 = vmatpush1.bf16.msra.mxu0 0
    %650 = vmatprep.subr.bf16.mxu0 0
    %651 = vmatpush1.bf16.msra.mxu0 0
    %652 = vmatprep.subr.bf16.mxu0 0
    %653 = vmatpush1.bf16.msra.mxu0 0
    %654 = vmatprep.subr.bf16.mxu0 0
    %655 = vmatpush1.bf16.msra.mxu0 0
    %656 = vmatprep.subr.bf16.mxu0 0
    %657 = vmatpush1.bf16.msra.mxu0 0
    %658 = vmatprep.subr.bf16.mxu0 0
    %659 = vmatpush1.bf16.msra.mxu0 0
    %660 = vmatprep.subr.bf16.mxu0 0
    %661 = vmatpush1.bf16.msra.mxu0 0
    %662 = vmatprep.subr.bf16.mxu0 0
    %663 = vmatpush1.bf16.msra.mxu0 0
    %664 = vmatprep.mubr.bf16.mxu0 0
    %665 = vmatmul.mubr.bf16.gmra.mrb[0].mxu0 %v565
    %v666 = vpop.f32.mrb[0].mxu0
    %v667 = vadd.f32 0.0, %v666
    %v668 = vpop.f32.mrb[0].mxu0
    %v669 = vpop.f32.mrb[0].mxu0
    %v670 = vadd.f32 0.0, %v669
    %v671 = vpop.f32.mrb[0].mxu0
    %672 = vmatprep.mubr.bf16.mxu0 0
    %673 = vmatmul.mubr.bf16.gmra.mrb[0].mxu0 %v566
    %v674 = vpop.f32.mrb[0].mxu0
    %v675 = vadd.f32 0.0, %v674
    %v676 = vpop.f32.mrb[0].mxu0
    %v677 = vpop.f32.mrb[0].mxu0
    %v678 = vadd.f32 0.0, %v677
    %v679 = vpop.f32.mrb[0].mxu0
    %680 = vdwg.mxu0
    %v681 = vadd.f32 %v547, %v667
    %v682 = vadd.f32 %v550, %v670
    %v683 = vadd.f32 %v555, %v675
    %v684 = vadd.f32 %v558, %v678
    %v685 = vadd.f32 %v681, %v682
    %v686 = vadd.f32 %v685, %v683
    %v687 = vadd.f32 %v686, %v684
    %v688 = vrot.slane %v687, 4
    %v689 = vadd.f32 %v687, %v688
    %v690 = vrot.slane %v689, 2
    %v691 = vadd.f32 %v689, %v690
    %v692 = vrot.slane %v691, 1
    %v693 = vadd.f32 %v691, %v692
    %v694 = vmul.f32 %v681, %v681
    %v695 = vmul.f32 %v682, %v682
    %v696 = vmul.f32 %v683, %v683
    %v697 = vmul.f32 %v684, %v684
    %v698 = vadd.f32 %v694, %v695
    %v699 = vadd.f32 %v698, %v696
    %v700 = vadd.f32 %v699, %v697
    %v701 = vrot.slane %v700, 4
    %v702 = vadd.f32 %v700, %v701
    %v703 = vrot.slane %v702, 2
    %v704 = vadd.f32 %v702, %v703
    %v705 = vrot.slane %v704, 1
    %v706 = vadd.f32 %v704, %v705
    %v707 = vmul.f32 %v693, 0.03125
    %v708 = vmul.f32 %v706, 0.03125
    %v709 = vmul.f32 %v707, %v707
    %v710 = vsub.f32 %v708, %v709
    %v711 = vmax.f32 %v710, 0.0
    %v712 = vld [vmem:[%s4] sm:$0x1]
    %v713 = vld [vmem:[%s4 + $0x1] sm:$0x1]
    %v714 = vadd.f32 %v711, 1e-05
    %v715 = vrsqrt.pop %v714
    %v716 = vmul.f32 %v712, %v715
    %v717 = vmul.f32 %v707, %v716
    %v718 = vsub.f32 %v713, %v717
    %v719 = vlaneseq
    %v720 = vshrl.u32 %v719, 7
    %v721 = vsub.s32 0, %v720
    %v722 = vrot.slane %v716, %v721
    %v723 = vmul.f32 %v681, %v722
    %v724 = vmul.f32 %v682, %v722
    %v725 = vmul.f32 %v683, %v722
    %v726 = vmul.f32 %v684, %v722
    %v727 = vlaneseq
    %v728 = vshrl.u32 %v727, 7
    %v729 = vsub.s32 0, %v728
    %v730 = vrot.slane %v718, %v729
    %v731 = vadd.f32 %v723, %v730
    %v732 = vadd.f32 %v724, %v730
    %v733 = vadd.f32 %v725, %v730
    %v734 = vadd.f32 %v726, %v730
    %vm735 = vcmp.ge.f32.partialorder %v731, 0.0
    %vm736 = vcmp.ge.f32.partialorder %v732, 0.0
    %vm737 = vcmp.ge.f32.partialorder %v733, 0.0
    %vm738 = vcmp.ge.f32.partialorder %v734, 0.0
    %v739 = vmul.f32 %v731, 0.2
    %v740 = vmul.f32 %v732, 0.2
    %v741 = vmul.f32 %v733, 0.2
    %v742 = vmul.f32 %v734, 0.2
    %v743 = vsel %vm735, %v731, %v739
    %v744 = vsel %vm736, %v732, %v740
    %v745 = vsel %vm737, %v733, %v741
    %v746 = vsel %vm738, %v734, %v742
    %747 = vst [vmem:[#allocation7] sm:$0xff] %v743
    %748 = vst [vmem:[#allocation7 + $0x8] sm:$0xff] %v744
    %749 = vst [vmem:[#allocation7 + $0x10] sm:$0xff] %v745
    %750 = vst [vmem:[#allocation7 + $0x18] sm:$0xff] %v746
    // Predicated region
    $region26: #{tpu_custom_call.1} parent=1 // pred_check
      _
    $region27: #{tpu_custom_call.1} parent=1 // pred_check_branch
      %752 = sbr.rel (0) target = $region29
    $region28: #{tpu_custom_call.1} parent=1 // pred_region
      %s754 = ssub.s32 512, 512
      %755 = vsyncadd [#allocation6], %s754
      %s756 = sshll.u32 [#allocation7], 4
      %s757 = int_to_ptr.vmem [resolvable:$true] %s756
      %762 = dma.vmem_to_hbm [thread:$0]  %s757, 512, %s5, [#allocation6], 128, 128, 8
    $region29: #{tpu_custom_call.1} parent=1 // pred_fallthru
      _
    // Predicated region
    $region30: #{tpu_custom_call.1} parent=1 // pred_check
      _
    $region31: #{tpu_custom_call.1} parent=1 // pred_check_branch
      %764 = sbr.rel (0) target = $region33
    $region32: #{tpu_custom_call.1} parent=1 // pred_region
      %765 = dma.done [#allocation6], 512
    $region33: #{tpu_custom_call.1} parent=1 // pred_fallthru
      _
    %766 = vsyncpa [#allocation5], 1
    %767 = vsyncpa [#allocation6], 1

</llo_original>
